<compile_context>
chip_gen: v7x
topology: tpu7x:2x2x1
jax: 0.10.0
libtpu: 0.0.40
codegen_flags: <defaults>
</compile_context>

<pallas_src>
import math

import jax
import jax.numpy as jnp
from jax.experimental import pallas as pl
from jax.experimental.pallas import tpu as pltpu

_LANE = 128
_SUBLANE = 8
_MIB = 1024 * 1024


def _round_up(x, m):
    return ((x + m - 1) // m) * m


def _tpu_kind():
    try:
        return jax.devices()[0].device_kind.lower()
    except Exception:
        return ""


def _make_partial_kernel(needs_mask, last_valid):
    """Per-grid-step kernel: per-column sum of squared error for one row tile."""

    def kernel(out_ref, tgt_ref, part_ref):
        o = out_ref[...].astype(jnp.float32)
        t = tgt_ref[...].astype(jnp.float32)
        d = o - t
        if needs_mask:  # static: only compiled in when the last tile is ragged
            is_last = pl.program_id(0) == pl.num_programs(0) - 1
            valid_rows = jnp.where(is_last, last_valid, d.shape[0])
            row_idx = jax.lax.broadcasted_iota(jnp.int32, d.shape, 0)
            d = jnp.where(row_idx < valid_rows, d, 0.0)
        ssq = jnp.sum(d * d, axis=0, keepdims=True)        # (1, cols)
        part_ref[...] = ssq.reshape(part_ref.shape)        # (1, 1, cols)

    return kernel


def weighted_mse_loss(outputs, targets, weights, *, row_tile=None):
    """Weighted MSE via Pallas. outputs/targets: (N, M); weights: (M,) or (1, M)."""
    weights = jnp.asarray(weights)
    if weights.ndim == 1:
        weights = weights.reshape(1, -1)
    N, M = outputs.shape
    assert targets.shape == (N, M)
    assert weights.shape == (1, M)
    total_elems = N * M

    kind = _tpu_kind()
    is_v56 = ("v5" in kind) or ("v6" in kind)
    is_v7 = "v7" in kind
    target_block_bytes = 8 * _MIB if is_v56 else 4 * _MIB   # conservative on v7x/unknown
    vmem_limit = 64 * _MIB if is_v56 else 32 * _MIB

    # ---- lane-dense fold (only when it is a free bitcast reshape) ----------
    r = _LANE // math.gcd(M, _LANE)
    folded = (r > 1) and (N >= r) and (N % r == 0)
    if folded:
        rows, cols = N // r, M * r
        o2 = outputs.reshape(rows, cols)                    # contiguous -> no copy
        t2 = targets.reshape(rows, cols)
    else:
        r = 1
        rows, cols = N, M                                   # full-M blocks: contiguous HBM reads
        o2, t2 = outputs, targets

    # ---- row-tile sizing from the actual VMEM footprint --------------------
    cols_pad = _round_up(cols, _LANE)                       # lane padding in VMEM
    itemsize = int(jnp.dtype(outputs.dtype).itemsize)
    if row_tile is None:
        rt = target_block_bytes // (cols_pad * itemsize)
    else:
        rt = int(row_tile)
    rt = max(_SUBLANE, (rt // _SUBLANE) * _SUBLANE)
    if rt >= rows:
        rt = rows                                           # single full-extent block (legal)
    num_blocks = -(-rows // rt)

    # ---- v7x: keep both TensorCores busy on the "parallel" axis ------------
    if is_v7 and num_blocks > 1:
        rt_try, nb_try = rt, num_blocks
        for _ in range(16):
            if nb_try % 2 == 0 and nb_try >= 4:
                break
            if rt_try <= _SUBLANE:
                break
            rt_try -= _SUBLANE
            nb_try = -(-rows // rt_try)
        if nb_try % 2 == 0:
            rt, num_blocks = rt_try, nb_try

    last_valid = rows - (num_blocks - 1) * rt
    needs_mask = last_valid != rt                           # static Python bool

    in_bytes = rows * cols * 2 * itemsize
    cost = pl.CostEstimate(
        flops=3 * rows * cols,
        transcendentals=0,
        bytes_accessed=in_bytes + num_blocks * cols * 4,
    )

    partials = pl.pallas_call(
        _make_partial_kernel(needs_mask, last_valid),
        out_shape=jax.ShapeDtypeStruct((num_blocks, 1, cols), jnp.float32),
        grid_spec=pltpu.PrefetchScalarGridSpec(
            num_scalar_prefetch=0,
            grid=(num_blocks,),
            in_specs=[
                pl.BlockSpec((rt, cols), lambda i: (i, 0)),   # outputs row tile
                pl.BlockSpec((rt, cols), lambda i: (i, 0)),   # targets row tile
            ],
            out_specs=pl.BlockSpec((1, 1, cols), lambda i: (i, 0, 0)),
        ),
        compiler_params=pltpu.CompilerParams(
            dimension_semantics=("parallel",),               # shard across TCs on v7x
            vmem_limit_bytes=vmem_limit,
        ),
        cost_estimate=cost,
    )(o2, t2)

    # Tiny epilogue on (num_blocks, 1, cols): unfold, apply weights once, normalize.
    col_ss = jnp.sum(partials, axis=(0, 1))                  # (cols,)
    if r > 1:
        col_ss = col_ss.reshape(r, M).sum(axis=0)            # (M,)
    w = weights[0].astype(jnp.float32)                       # (M,)
    weighted = jnp.dot(col_ss, w)
    return weighted * jnp.float32(1.0 / float(total_elems))


def _reference(outputs, targets, weights):
    weights = jnp.asarray(weights)
    if weights.ndim == 1:
        weights = weights.reshape(1, -1)
    o = outputs.astype(jnp.float32)
    t = targets.astype(jnp.float32)
    return jnp.mean(weights.astype(jnp.float32) * (o - t) ** 2)


if __name__ == "__main__":
    key = jax.random.PRNGKey(0)

    # (N, M, dtype, row_tile) cases exercising: lane-dense fold, 128-multiple M,
    # awkward-M fallback, ragged-last-tile in-kernel masking (unfolded + folded),
    # and itemsize-aware tiling for bf16.
    cases = [
        (8, 32, jnp.float32, None),     # fold r=4, single block
        (24, 256, jnp.float32, None),   # M multiple of 128, r=1
        (13, 200, jnp.float32, None),   # awkward M, no fold (N < r), full block
        (13, 200, jnp.float32, 8),      # ragged last tile -> masked in kernel
        (40, 32, jnp.float32, 8),       # folded rows + ragged last tile mask
        (32, 128, jnp.bfloat16, None),  # narrow dtype, itemsize-based tile sizing
    ]
    for N, M, dt, rtile in cases:
        k_o, k_t, k_w, key = jax.random.split(key, 4)
        outputs = jax.random.normal(k_o, (N, M), dtype=jnp.float32).astype(dt)
        targets = jax.random.normal(k_t, (N, M), dtype=jnp.float32).astype(dt)
        weights = jax.random.uniform(k_w, (1, M), dtype=jnp.float32)

        loss = jax.block_until_ready(
            weighted_mse_loss(outputs, targets, weights, row_tile=rtile))
        ref = _reference(outputs, targets, weights)
        assert jnp.allclose(loss, ref, rtol=1e-5, atol=1e-6), (N, M, str(dt), loss, ref)

    print("KERNEL_OK")
</pallas_src>

<mosaic_0001>
module attributes {stable_mosaic.version = 11 : i64} {
  func.func @kernel(%arg0: i32, %arg1: memref<2x128xf32, #tpu.memory_space<vmem>>, %arg2: memref<2x128xf32, #tpu.memory_space<vmem>>, %arg3: memref<1x1x128xf32, #tpu.memory_space<vmem>>) attributes {dimension_semantics = [#tpu.dimension_semantics<parallel>], iteration_bounds = array<i64: 1>, scalar_prefetch = 0 : i64, scratch_operands = 0 : i64, tpu.core_type = #tpu.core_type<tc>, window_params = [{transform_indices = @transform_0, window_bounds = array<i64: 2, 128>}, {transform_indices = @transform_1, window_bounds = array<i64: 2, 128>}, {transform_indices = @transform_2, window_bounds = array<i64: 1, 1, 128>}]} {
    %c0 = arith.constant 0 : index
    %c0_0 = arith.constant 0 : index
    %0 = vector.load %arg1[%c0, %c0_0] : memref<2x128xf32, #tpu.memory_space<vmem>>, vector<2x128xf32>
    %c0_1 = arith.constant 0 : index
    %c0_2 = arith.constant 0 : index
    %1 = vector.load %arg2[%c0_1, %c0_2] : memref<2x128xf32, #tpu.memory_space<vmem>>, vector<2x128xf32>
    %2 = arith.subf %0, %1 : vector<2x128xf32>
    %3 = arith.mulf %2, %2 : vector<2x128xf32>
    %cst = arith.constant dense<0.000000e+00> : vector<128xf32>
    %4 = vector.multi_reduction <add>, %3, %cst [0] : vector<2x128xf32> to vector<128xf32>
    %5 = vector.shape_cast %4 : vector<128xf32> to vector<1x128xf32>
    %6 = vector.shape_cast %5 : vector<1x128xf32> to vector<1x1x128xf32>
    %c0_3 = arith.constant 0 : index
    %c0_4 = arith.constant 0 : index
    %c0_5 = arith.constant 0 : index
    %7 = vector.load %arg3[%c0_3, %c0_4, %c0_5] : memref<1x1x128xf32, #tpu.memory_space<vmem>>, vector<1x1x128xf32>
    tpu.vector_store %arg3[%c0_3, %c0_4, %c0_5], %6 {strides = array<i32>} : memref<1x1x128xf32, #tpu.memory_space<vmem>>, vector<1x1x128xf32>,
    return
  }
  func.func @transform_0(%arg0: i32) -> (i32, i32) {
    %c0_i32 = arith.constant 0 : i32
    %c0_i32_0 = arith.constant 0 : i32
    return %arg0, %c0_i32 : i32, i32
  }
  func.func @transform_1(%arg0: i32) -> (i32, i32) {
    %c0_i32 = arith.constant 0 : i32
    %c0_i32_0 = arith.constant 0 : i32
    return %arg0, %c0_i32 : i32, i32
  }
  func.func @transform_2(%arg0: i32) -> (i32, i32, i32) {
    %c0_i32 = arith.constant 0 : i32
    %c0_i32_0 = arith.constant 0 : i32
    %c0_i32_1 = arith.constant 0 : i32
    return %arg0, %c0_i32, %c0_i32_0 : i32, i32, i32
  }
}

</mosaic_0001>

<llo_original>
// kernel: tpu_custom_call.1
$region0: #{tpu_custom_call.1}
  #allocation0 [shape = 'u32[]', space=smem, size = 0x4, offset = 0x4, fixed_abs, tag = 'smem constant byte address 0x4 - core index']
  #allocation1 [shape = 'u32[144,128]{1,0:T(1,128)}', space=vmem, size = 0x12000, scoped, tag = 'internal scratch']
  %s0 = inlined_call_operand.hbm [shape: f32[2,128], index: 0, kind: input, shape index: {}]
  %s1 = inlined_call_operand.vmem [shape: f32[2,128], index: 1, kind: input, shape index: {}]
  %s2 = inlined_call_operand.hbm [shape: f32[1,1,128], index: 2, kind: output, shape index: {}]
  %s3 = sld [smem:[#allocation0]]
  $region22: #{tpu_custom_call.1} parent=0
    _
  %s5 = ssub.s32 1, %s3
  %s6 = scalar_select 0, %s5, %s3
  $region1: #{tpu_custom_call.1} parent=0
    #allocation2 [shape = 'u8[1024]{0}', space=vmem, size = 0x400, scoped, tag = 'input window, operand 0, single buffered']
    #allocation3 [shape = 's32[1]{0}', space=sflag, size = 0x4, scoped, tag = 'scoped memory for tpu_custom_call.1']
    #allocation4 [shape = 's32[1]{0}', space=sflag, size = 0x4, scoped, tag = 'scoped memory for tpu_custom_call.1']
    #allocation5 [shape = 'u8[512]{0}', space=vmem, size = 0x400, scoped, tag = 'output window, operand 0, single buffered']
    %7 = vsyncpa [#allocation3], 0
    %8 = vsyncpa [#allocation4], 0
    // Predicated region
    $region2: #{tpu_custom_call.1} parent=1 // pred_check
      _
    $region3: #{tpu_custom_call.1} parent=1 // pred_check_branch
      %10 = sbr.rel (0) target = $region5
    $region4: #{tpu_custom_call.1} parent=1 // pred_region
      %s12 = ssub.s32 32, 32
      %13 = vsyncadd [#allocation3], %s12
      %s15 = sshll.u32 [#allocation2], 4
      %s16 = int_to_ptr.vmem [resolvable:$true] %s15
      %18 = dma.hbm_to_vmem [thread:$0]  %s0, 32, %s16, [#allocation3]
    $region5: #{tpu_custom_call.1} parent=1 // pred_fallthru
      _
    // Predicated region
    $region6: #{tpu_custom_call.1} parent=1 // pred_check
      _
    $region7: #{tpu_custom_call.1} parent=1 // pred_check_branch
      %20 = sbr.rel (0) target = $region9
    $region8: #{tpu_custom_call.1} parent=1 // pred_region
      _
    $region9: #{tpu_custom_call.1} parent=1 // pred_fallthru
      _
    // Predicated region
    $region10: #{tpu_custom_call.1} parent=1 // pred_check
      _
    $region11: #{tpu_custom_call.1} parent=1 // pred_check_branch
      %22 = sbr.rel (0) target = $region13
    $region12: #{tpu_custom_call.1} parent=1 // pred_region
      %23 = dma.done [#allocation3], 32
    $region13: #{tpu_custom_call.1} parent=1 // pred_fallthru
      _
    %v24 = vld [vmem:[#allocation2] sm:$0x3]
    %v25 = vld [vmem:[%s1] sm:$0x3]
    %v26 = vsub.f32 %v24, %v25
    %v27 = vmul.f32 %v26, %v26
    %vm28 = vcmask 1041408
    %v29 = vsel %vm28, %v27, 0.0
    %v30 = vrot.slane %v29, 4
    %v31 = vadd.f32 %v29, %v30
    %v32 = vrot.slane %v31, 2
    %v33 = vadd.f32 %v31, %v32
    %v34 = vrot.slane %v33, 1
    %v35 = vadd.f32 %v33, %v34
    %36 = vst [vmem:[#allocation5] sm:$0x1] %v35
    // Predicated region
    $region14: #{tpu_custom_call.1} parent=1 // pred_check
      _
    $region15: #{tpu_custom_call.1} parent=1 // pred_check_branch
      %38 = sbr.rel (0) target = $region17
    $region16: #{tpu_custom_call.1} parent=1 // pred_region
      %s40 = ssub.s32 16, 16
      %41 = vsyncadd [#allocation4], %s40
      %s43 = sshll.u32 [#allocation5], 4
      %s44 = int_to_ptr.vmem [resolvable:$true] %s43
      %46 = dma.vmem_to_hbm [thread:$0]  %s44, 16, %s2, [#allocation4]
    $region17: #{tpu_custom_call.1} parent=1 // pred_fallthru
      _
    // Predicated region
    $region18: #{tpu_custom_call.1} parent=1 // pred_check
      _
    $region19: #{tpu_custom_call.1} parent=1 // pred_check_branch
      %48 = sbr.rel (0) target = $region21
    $region20: #{tpu_custom_call.1} parent=1 // pred_region
      %49 = dma.done [#allocation4], 16
    $region21: #{tpu_custom_call.1} parent=1 // pred_fallthru
      _
    %50 = vsyncpa [#allocation3], 1
    %51 = vsyncpa [#allocation4], 1

</llo_original>
